<compile_context>
chip_gen: v6e
topology: v6e:2x2x1
jax: 0.10.0
libtpu: 0.0.40
codegen_flags: <defaults>
</compile_context>

<pallas_src>
import jax
import jax.numpy as jnp
from jax import lax
from jax.experimental import pallas as pl
from jax.experimental.pallas import tpu as pltpu


# Try to single-buffer grid-invariant blocks (weights/biases). Falls back
# automatically if the installed JAX rejects pl.Buffered(1).
_SINGLE_BUFFER_INVARIANT = True


def _gelu_exact(x):
    # torch.nn.GELU() default is the exact erf formulation.
    return 0.5 * x * (1.0 + lax.erf(x * 0.7071067811865476))


def _round_up(x, m):
    return (x + m - 1) // m * m


def _pad_to(a, shape):
    pads = tuple((0, t - s) for s, t in zip(a.shape, shape))
    if all(p == (0, 0) for p in pads):
        return a  # already aligned: skip the HBM copy entirely
    return jnp.pad(a, pads)


def _vmem_cap_bytes():
    """Generation-aware cap for vmem_limit_bytes."""
    try:
        kind = jax.devices()[0].device_kind.lower()
    except Exception:
        kind = ""
    if "v7" in kind or "7x" in kind:
        return 48 * 1024 * 1024   # v7x: 64 MiB physical per TC -> leave headroom
    if "v5" in kind or "v6" in kind:
        return 96 * 1024 * 1024   # v5e/v6e: 128 MiB physical
    return 64 * 1024 * 1024       # unknown chip: conservative


def _vmem_bytes(tm, cin, th, cout, itemsize, single_buf, full_hidden):
    """Estimated VMEM footprint of one grid step (incl. pipelining buffers)."""
    wb = 1 if single_buf else 2          # buffering for grid-invariant blocks
    wdb = wb if full_hidden else 2       # w1/b1/w2: invariant only on full-hidden path
    return int(
        2 * tm * cin * itemsize          # x tile (double-buffered)
        + wdb * cin * th * itemsize      # w1 tile
        + wdb * 8 * th * itemsize        # b1 tile (sublane-padded)
        + wdb * th * cout * itemsize     # w2 tile
        + wb * 8 * cout * itemsize       # b2 tile (always grid-invariant)
        + 2 * tm * cout * itemsize       # output tile (double-buffered)
        + tm * th * (4 + itemsize)       # f32 hidden intermediate + cast copy
        + tm * cout * 4                  # f32 accumulator / pre-cast result
    )


# --------------------------------------------------------------------------
# Kernels
# --------------------------------------------------------------------------

def mlp_kernel_fused(x_ref, w1_ref, b1_ref, w2_ref, b2_ref, o_ref):
    """Full-hidden path: one grid axis over row tiles, weights grid-invariant."""
    x = x_ref[...]
    h = jnp.dot(x, w1_ref[...], preferred_element_type=jnp.float32)
    h = _gelu_exact(h + b1_ref[...].astype(jnp.float32))
    # Dropout(p=0.0) is an identity -> nothing to do.
    h = h.astype(x.dtype)  # feed MXU at native input dtype, accumulate in f32
    y = jnp.dot(h, w2_ref[...], preferred_element_type=jnp.float32)
    o_ref[...] = (y + b2_ref[...].astype(jnp.float32)).astype(o_ref.dtype)


def mlp_kernel_tiled(x_ref, w1_ref, b1_ref, w2_ref, b2_ref, o_ref, acc_ref):
    """Hidden-tiled path: grid=(n_row, n_hid), reduction over the hidden axis."""
    j = pl.program_id(1)
    x = x_ref[...]
    h = jnp.dot(x, w1_ref[...], preferred_element_type=jnp.float32)
    h = _gelu_exact(h + b1_ref[...].astype(jnp.float32))
    h = h.astype(x.dtype)
    part = jnp.dot(h, w2_ref[...], preferred_element_type=jnp.float32)

    @pl.when(j == 0)
    def _init():
        # Fold b2 into the first partial -> no zero-init + no epilogue add.
        acc_ref[...] = part + b2_ref[...].astype(jnp.float32)

    @pl.when(j != 0)
    def _accum():
        acc_ref[...] += part

    @pl.when(j == pl.num_programs(1) - 1)
    def _finalize():
        o_ref[...] = acc_ref[...].astype(o_ref.dtype)


# --------------------------------------------------------------------------
# Wrapper
# --------------------------------------------------------------------------

def mlp_pallas(x, w1, b1, w2, b2, *, tm=512, th=None, compute_dtype=None):
    """x: (B, N, C_in). Weights stored as (in, out) [transposed from PyTorch's
    (out, in)].  Returns (B, N, C_out).

    tm: row tile (sweepable: 256/512/1024).
    th: force a hidden tile (multiple of 128); None -> auto (full hidden when it fits).
    compute_dtype: optional MXU operand dtype (e.g. jnp.bfloat16) for f32 inputs;
                   accumulation stays f32.  None keeps exact input-dtype math.
    """
    B, N, C_in = x.shape
    C_in_w, C_hid = w1.shape
    C_hid_w, C_out = w2.shape
    assert C_in == C_in_w and C_hid == C_hid_w

    if compute_dtype is not None:
        x = x.astype(compute_dtype)
        w1 = w1.astype(compute_dtype)
        b1 = b1.astype(compute_dtype)
        w2 = w2.astype(compute_dtype)
        b2 = b2.astype(compute_dtype)

    M = B * N
    dtype = x.dtype
    itemsize = jnp.dtype(dtype).itemsize

    # Lane-dense padding: all feature dims to multiples of 128.
    C_in_p = _round_up(C_in, 128)
    C_out_p = _round_up(C_out, 128)
    C_hid_p = _round_up(C_hid, 128)

    # Row tile: multiple of 8; keep >= 2 row tiles when M allows so the parallel
    # axis can be split across v7x's two TensorCores.
    tm_eff = _round_up(min(tm, _round_up(M, 8)), 8)
    if _round_up(M, tm_eff) // tm_eff < 2 and M > 8:
        tm_eff = _round_up((M + 1) // 2, 8)
    M_p = _round_up(M, tm_eff)
    n_row = M_p // tm_eff

    vmem_cap = _vmem_cap_bytes()
    budget = int(vmem_cap * 0.85)
    sb = _SINGLE_BUFFER_INVARIANT

    # Choose full-hidden vs hidden-tiled.
    if th is None:
        full_hidden = _vmem_bytes(tm_eff, C_in_p, C_hid_p, C_out_p,
                                  itemsize, sb, True) <= budget
        if full_hidden:
            th_eff = C_hid_p
        else:
            # TODO(synk): for very large C_out on v7x, add a third (parallel) grid
            # axis over C_out instead of only shrinking the hidden tile.
            th_eff = 128
            for cand in (2048, 1024, 512, 256, 128):
                if cand <= C_hid_p and _vmem_bytes(tm_eff, C_in_p, cand, C_out_p,
                                                   itemsize, sb, False) <= budget:
                    th_eff = cand
                    break
    else:
        th_eff = _round_up(min(th, C_hid_p), 128)
        full_hidden = th_eff >= C_hid_p

    if full_hidden:
        th_eff = C_hid_p
        n_hid = 1
    else:
        n_hid = -(-C_hid_p // th_eff)
        C_hid_p = n_hid * th_eff

    est_vmem = _vmem_bytes(tm_eff, C_in_p, th_eff, C_out_p, itemsize, sb, full_hidden)
    vmem_limit = int(min(max(int(est_vmem * 1.25), 16 * 1024 * 1024), vmem_cap))

    # Zero-padding is exact for this op graph: gelu(0)=0 and padded weight
    # rows/cols are zero, so padded lanes contribute nothing to valid outputs.
    x2 = _pad_to(x.reshape(M, C_in), (M_p, C_in_p))
    w1_p = _pad_to(w1, (C_in_p, C_hid_p))
    b1_p = _pad_to(b1.reshape(1, C_hid), (1, C_hid_p))
    w2_p = _pad_to(w2, (C_hid_p, C_out_p))
    b2_p = _pad_to(b2.reshape(1, C_out), (1, C_out_p))

    # Cost estimate reflecting actual HBM traffic (weights fetched once on the
    # full-hidden path, once per row tile on the tiled path).
    wt_bytes = (C_in * C_hid + C_hid * C_out) * itemsize
    weight_reads = 1 if full_hidden else n_row
    cost = pl.CostEstimate(
        flops=2 * M * C_in * C_hid + 2 * M * C_hid * C_out,
        transcendentals=M * C_hid,
        bytes_accessed=((M * C_in + M * C_out) * itemsize
                        + weight_reads * wt_bytes
                        + (C_hid + C_out) * itemsize),
    )

    def _invoke(single_buffer):
        inv = dict(pipeline_mode=pl.Buffered(1)) if single_buffer else {}
        if full_hidden:
            grid = (n_row,)
            in_specs = [
                pl.BlockSpec((tm_eff, C_in_p), lambda i: (i, 0)),
                pl.BlockSpec((C_in_p, C_hid_p), lambda i: (0, 0), **inv),
                pl.BlockSpec((1, C_hid_p), lambda i: (0, 0), **inv),
                pl.BlockSpec((C_hid_p, C_out_p), lambda i: (0, 0), **inv),
                pl.BlockSpec((1, C_out_p), lambda i: (0, 0), **inv),
            ]
            out_specs = pl.BlockSpec((tm_eff, C_out_p), lambda i: (i, 0))
            scratch = []
            kernel = mlp_kernel_fused
            dims = ("parallel",)
        else:
            grid = (n_row, n_hid)  # reduction (hidden) axis last
            in_specs = [
                pl.BlockSpec((tm_eff, C_in_p), lambda i, j: (i, 0)),
                pl.BlockSpec((C_in_p, th_eff), lambda i, j: (0, j)),
                pl.BlockSpec((1, th_eff), lambda i, j: (0, j)),
                pl.BlockSpec((th_eff, C_out_p), lambda i, j: (j, 0)),
                pl.BlockSpec((1, C_out_p), lambda i, j: (0, 0), **inv),
            ]
            out_specs = pl.BlockSpec((tm_eff, C_out_p), lambda i, j: (i, 0))
            scratch = [pltpu.VMEM((tm_eff, C_out_p), jnp.float32)]
            kernel = mlp_kernel_tiled
            dims = ("parallel", "arbitrary")

        return pl.pallas_call(
            kernel,
            out_shape=jax.ShapeDtypeStruct((M_p, C_out_p), dtype),
            grid_spec=pltpu.PrefetchScalarGridSpec(
                num_scalar_prefetch=0,
                grid=grid,
                in_specs=in_specs,
                out_specs=out_specs,
                scratch_shapes=scratch,
            ),
            compiler_params=pltpu.CompilerParams(
                dimension_semantics=dims,
                vmem_limit_bytes=vmem_limit,
            ),
            cost_estimate=cost,
        )(x2, w1_p, b1_p, w2_p, b2_p)

    if sb:
        try:
            out = _invoke(True)
        except Exception:
            # Installed JAX rejected single-buffered (Buffered(1)) specs; fall
            # back to default double buffering.
            out = _invoke(False)
    else:
        out = _invoke(False)

    return out[:M, :C_out].reshape(B, N, C_out)


def mlp_reference(x, w1, b1, w2, b2):
    h = x @ w1 + b1
    h = _gelu_exact(h)
    return h @ w2 + b2


if __name__ == "__main__":
    key = jax.random.PRNGKey(0)

    # --- Test 1: shapes consistent with the module (in=32, hidden=64, out=32) ---
    B, N = 2, 8
    C_in, C_hid, C_out = 32, 64, 32
    kx, k1, kb1, k2, kb2, key = jax.random.split(key, 6)
    x = jax.random.normal(kx, (B, N, C_in), dtype=jnp.float32)
    w1 = jax.random.normal(k1, (C_in, C_hid), dtype=jnp.float32) * (1.0 / jnp.sqrt(C_in))
    b1 = jax.random.normal(kb1, (C_hid,), dtype=jnp.float32) * 0.01
    w2 = jax.random.normal(k2, (C_hid, C_out), dtype=jnp.float32) * (1.0 / jnp.sqrt(C_hid))
    b2 = jax.random.normal(kb2, (C_out,), dtype=jnp.float32) * 0.01

    y = mlp_pallas(x, w1, b1, w2, b2)          # auto: full-hidden fused path
    jax.block_until_ready(y)
    y_ref = mlp_reference(x, w1, b1, w2, b2)
    assert y.shape == (B, N, C_out)
    assert jnp.allclose(y, y_ref, atol=1e-4, rtol=1e-4), "mismatch vs reference (test 1)"

    # --- Test 2: ragged / padded shapes forcing the hidden-tiled (accumulator) path ---
    B2, N2 = 3, 13                    # M = 39 (ragged, not a tile multiple)
    Ci2, Ch2, Co2 = 48, 320, 80       # all non-multiples of 128
    kx, k1, kb1, k2, kb2, key = jax.random.split(key, 6)
    x_b = jax.random.normal(kx, (B2, N2, Ci2), dtype=jnp.float32)
    w1_b = jax.random.normal(k1, (Ci2, Ch2), dtype=jnp.float32) * (1.0 / jnp.sqrt(Ci2))
    b1_b = jax.random.normal(kb1, (Ch2,), dtype=jnp.float32) * 0.01
    w2_b = jax.random.normal(k2, (Ch2, Co2), dtype=jnp.float32) * (1.0 / jnp.sqrt(Ch2))
    b2_b = jax.random.normal(kb2, (Co2,), dtype=jnp.float32) * 0.01

    y_b = mlp_pallas(x_b, w1_b, b1_b, w2_b, b2_b, tm=32, th=128)  # forces n_hid > 1
    jax.block_until_ready(y_b)
    y_b_ref = mlp_reference(x_b, w1_b, b1_b, w2_b, b2_b)
    assert y_b.shape == (B2, N2, Co2)
    assert jnp.allclose(y_b, y_b_ref, atol=1e-4, rtol=1e-4), "mismatch vs reference (test 2)"

    print("KERNEL_OK")
</pallas_src>

<mosaic_0001>
module attributes {stable_mosaic.version = 11 : i64} {
  func.func @mlp_kernel_fused(%arg0: i32, %arg1: memref<8x128xf32, #tpu.memory_space<vmem>>, %arg2: memref<128x128xf32, #tpu.memory_space<vmem>>, %arg3: memref<1x128xf32, #tpu.memory_space<vmem>>, %arg4: memref<128x128xf32, #tpu.memory_space<vmem>>, %arg5: memref<1x128xf32, #tpu.memory_space<vmem>>, %arg6: memref<8x128xf32, #tpu.memory_space<vmem>>) attributes {dimension_semantics = [#tpu.dimension_semantics<parallel>], iteration_bounds = array<i64: 2>, scalar_prefetch = 0 : i64, scratch_operands = 0 : i64, tpu.core_type = #tpu.core_type<tc>, window_params = [{transform_indices = @transform_0, window_bounds = array<i64: 8, 128>}, {pipeline_mode = #tpu.pipeline_mode<synchronous>, transform_indices = @transform_1, window_bounds = array<i64: 128, 128>}, {pipeline_mode = #tpu.pipeline_mode<synchronous>, transform_indices = @transform_2, window_bounds = array<i64: 1, 128>}, {pipeline_mode = #tpu.pipeline_mode<synchronous>, transform_indices = @transform_3, window_bounds = array<i64: 128, 128>}, {pipeline_mode = #tpu.pipeline_mode<synchronous>, transform_indices = @transform_4, window_bounds = array<i64: 1, 128>}, {transform_indices = @transform_5, window_bounds = array<i64: 8, 128>}]} {
    %c0 = arith.constant 0 : index
    %c0_0 = arith.constant 0 : index
    %0 = vector.load %arg1[%c0, %c0_0] : memref<8x128xf32, #tpu.memory_space<vmem>>, vector<8x128xf32>
    %c0_1 = arith.constant 0 : index
    %c0_2 = arith.constant 0 : index
    %1 = vector.load %arg2[%c0_1, %c0_2] : memref<128x128xf32, #tpu.memory_space<vmem>>, vector<128x128xf32>
    %cst = arith.constant dense<0.000000e+00> : vector<8x128xf32>
    %2 = tpu.matmul %0, %1, %cst {dimension_numbers = #tpu.dot_dimension_numbers<[1], [0], [0], [1], [0, 0, 1, 1], [], []>} : vector<8x128xf32>, vector<128x128xf32>, vector<8x128xf32> -> vector<8x128xf32>
    %c0_3 = arith.constant 0 : index
    %c0_4 = arith.constant 0 : index
    %3 = vector.load %arg3[%c0_3, %c0_4] : memref<1x128xf32, #tpu.memory_space<vmem>>, vector<1x128xf32>
    %4 = vector.broadcast %3 : vector<1x128xf32> to vector<8x128xf32>
    %5 = arith.addf %2, %4 : vector<8x128xf32>
    %cst_5 = arith.constant 5.000000e-01 : f32
    %6 = vector.broadcast %cst_5 : f32 to vector<8x128xf32>
    %7 = arith.mulf %6, %5 : vector<8x128xf32>
    %cst_6 = arith.constant 0.707106769 : f32
    %8 = vector.broadcast %cst_6 : f32 to vector<8x128xf32>
    %9 = arith.mulf %5, %8 : vector<8x128xf32>
    %10 = math.erf %9 : vector<8x128xf32>
    %cst_7 = arith.constant 1.000000e+00 : f32
    %11 = vector.broadcast %cst_7 : f32 to vector<8x128xf32>
    %12 = arith.addf %11, %10 : vector<8x128xf32>
    %13 = arith.mulf %7, %12 : vector<8x128xf32>
    %c0_8 = arith.constant 0 : index
    %c0_9 = arith.constant 0 : index
    %14 = vector.load %arg4[%c0_8, %c0_9] : memref<128x128xf32, #tpu.memory_space<vmem>>, vector<128x128xf32>
    %cst_10 = arith.constant dense<0.000000e+00> : vector<8x128xf32>
    %15 = tpu.matmul %13, %14, %cst_10 {dimension_numbers = #tpu.dot_dimension_numbers<[1], [0], [0], [1], [0, 0, 1, 1], [], []>} : vector<8x128xf32>, vector<128x128xf32>, vector<8x128xf32> -> vector<8x128xf32>
    %c0_11 = arith.constant 0 : index
    %c0_12 = arith.constant 0 : index
    %16 = vector.load %arg5[%c0_11, %c0_12] : memref<1x128xf32, #tpu.memory_space<vmem>>, vector<1x128xf32>
    %17 = vector.broadcast %16 : vector<1x128xf32> to vector<8x128xf32>
    %18 = arith.addf %15, %17 : vector<8x128xf32>
    %c0_13 = arith.constant 0 : index
    %c0_14 = arith.constant 0 : index
    %19 = vector.load %arg6[%c0_13, %c0_14] : memref<8x128xf32, #tpu.memory_space<vmem>>, vector<8x128xf32>
    tpu.vector_store %arg6[%c0_13, %c0_14], %18 {strides = array<i32>} : memref<8x128xf32, #tpu.memory_space<vmem>>, vector<8x128xf32>,
    return
  }
  func.func @transform_0(%arg0: i32) -> (i32, i32) {
    %c0_i32 = arith.constant 0 : i32
    %c0_i32_0 = arith.constant 0 : i32
    return %arg0, %c0_i32 : i32, i32
  }
  func.func @transform_1(%arg0: i32) -> (i32, i32) {
    %c0_i32 = arith.constant 0 : i32
    %c0_i32_0 = arith.constant 0 : i32
    %c0_i32_1 = arith.constant 0 : i32
    return %c0_i32, %c0_i32_0 : i32, i32
  }
  func.func @transform_2(%arg0: i32) -> (i32, i32) {
    %c0_i32 = arith.constant 0 : i32
    %c0_i32_0 = arith.constant 0 : i32
    %c0_i32_1 = arith.constant 0 : i32
    return %c0_i32, %c0_i32_0 : i32, i32
  }
  func.func @transform_3(%arg0: i32) -> (i32, i32) {
    %c0_i32 = arith.constant 0 : i32
    %c0_i32_0 = arith.constant 0 : i32
    %c0_i32_1 = arith.constant 0 : i32
    return %c0_i32, %c0_i32_0 : i32, i32
  }
  func.func @transform_4(%arg0: i32) -> (i32, i32) {
    %c0_i32 = arith.constant 0 : i32
    %c0_i32_0 = arith.constant 0 : i32
    %c0_i32_1 = arith.constant 0 : i32
    return %c0_i32, %c0_i32_0 : i32, i32
  }
  func.func @transform_5(%arg0: i32) -> (i32, i32) {
    %c0_i32 = arith.constant 0 : i32
    %c0_i32_0 = arith.constant 0 : i32
    return %arg0, %c0_i32 : i32, i32
  }
}

module attributes {stable_mosaic.version = 11 : i64} {
  func.func @mlp_kernel_fused(%arg0: i32, %arg1: memref<8x128xf32, #tpu.memory_space<vmem>>, %arg2: memref<128x128xf32, #tpu.memory_space<vmem>>, %arg3: memref<1x128xf32, #tpu.memory_space<vmem>>, %arg4: memref<128x128xf32, #tpu.memory_space<vmem>>, %arg5: memref<1x128xf32, #tpu.memory_space<vmem>>, %arg6: memref<8x128xf32, #tpu.memory_space<vmem>>) attributes {dimension_semantics = [#tpu.dimension_semantics<parallel>], iteration_bounds = array<i64: 2>, scalar_prefetch = 0 : i64, scratch_operands = 0 : i64, tpu.core_type = #tpu.core_type<tc>, window_params = [{transform_indices = @transform_0, window_bounds = array<i64: 8, 128>}, {pipeline_mode = #tpu.pipeline_mode<synchronous>, transform_indices = @transform_1, window_bounds = array<i64: 128, 128>}, {pipeline_mode = #tpu.pipeline_mode<synchronous>, transform_indices = @transform_2, window_bounds = array<i64: 1, 128>}, {pipeline_mode = #tpu.pipeline_mode<synchronous>, transform_indices = @transform_3, window_bounds = array<i64: 128, 128>}, {pipeline_mode = #tpu.pipeline_mode<synchronous>, transform_indices = @transform_4, window_bounds = array<i64: 1, 128>}, {transform_indices = @transform_5, window_bounds = array<i64: 8, 128>}]} {
    %c0 = arith.constant 0 : index
    %c0_0 = arith.constant 0 : index
    %0 = vector.load %arg1[%c0, %c0_0] : memref<8x128xf32, #tpu.memory_space<vmem>>, vector<8x128xf32>
    %c0_1 = arith.constant 0 : index
    %c0_2 = arith.constant 0 : index
    %1 = vector.load %arg2[%c0_1, %c0_2] : memref<128x128xf32, #tpu.memory_space<vmem>>, vector<128x128xf32>
    %cst = arith.constant dense<0.000000e+00> : vector<8x128xf32>
    %2 = tpu.matmul %0, %1, %cst {dimension_numbers = #tpu.dot_dimension_numbers<[1], [0], [0], [1], [0, 0, 1, 1], [], []>} : vector<8x128xf32>, vector<128x128xf32>, vector<8x128xf32> -> vector<8x128xf32>
    %c0_3 = arith.constant 0 : index
    %c0_4 = arith.constant 0 : index
    %3 = vector.load %arg3[%c0_3, %c0_4] : memref<1x128xf32, #tpu.memory_space<vmem>>, vector<1x128xf32>
    %4 = vector.broadcast %3 : vector<1x128xf32> to vector<8x128xf32>
    %5 = arith.addf %2, %4 : vector<8x128xf32>
    %cst_5 = arith.constant 5.000000e-01 : f32
    %6 = vector.broadcast %cst_5 : f32 to vector<8x128xf32>
    %7 = arith.mulf %6, %5 : vector<8x128xf32>
    %cst_6 = arith.constant 0.707106769 : f32
    %8 = vector.broadcast %cst_6 : f32 to vector<8x128xf32>
    %9 = arith.mulf %5, %8 : vector<8x128xf32>
    %10 = math.erf %9 : vector<8x128xf32>
    %cst_7 = arith.constant 1.000000e+00 : f32
    %11 = vector.broadcast %cst_7 : f32 to vector<8x128xf32>
    %12 = arith.addf %11, %10 : vector<8x128xf32>
    %13 = arith.mulf %7, %12 : vector<8x128xf32>
    %c0_8 = arith.constant 0 : index
    %c0_9 = arith.constant 0 : index
    %14 = vector.load %arg4[%c0_8, %c0_9] : memref<128x128xf32, #tpu.memory_space<vmem>>, vector<128x128xf32>
    %cst_10 = arith.constant dense<0.000000e+00> : vector<8x128xf32>
    %15 = tpu.matmul %13, %14, %cst_10 {dimension_numbers = #tpu.dot_dimension_numbers<[1], [0], [0], [1], [0, 0, 1, 1], [], []>} : vector<8x128xf32>, vector<128x128xf32>, vector<8x128xf32> -> vector<8x128xf32>
    %c0_11 = arith.constant 0 : index
    %c0_12 = arith.constant 0 : index
    %16 = vector.load %arg5[%c0_11, %c0_12] : memref<1x128xf32, #tpu.memory_space<vmem>>, vector<1x128xf32>
    %17 = vector.broadcast %16 : vector<1x128xf32> to vector<8x128xf32>
    %18 = arith.addf %15, %17 : vector<8x128xf32>
    %c0_13 = arith.constant 0 : index
    %c0_14 = arith.constant 0 : index
    %19 = vector.load %arg6[%c0_13, %c0_14] : memref<8x128xf32, #tpu.memory_space<vmem>>, vector<8x128xf32>
    tpu.vector_store %arg6[%c0_13, %c0_14], %18 {strides = array<i32>} : memref<8x128xf32, #tpu.memory_space<vmem>>, vector<8x128xf32>,
    return
  }
  func.func @transform_0(%arg0: i32) -> (i32, i32) {
    %c0_i32 = arith.constant 0 : i32
    %c0_i32_0 = arith.constant 0 : i32
    return %arg0, %c0_i32 : i32, i32
  }
  func.func @transform_1(%arg0: i32) -> (i32, i32) {
    %c0_i32 = arith.constant 0 : i32
    %c0_i32_0 = arith.constant 0 : i32
    %c0_i32_1 = arith.constant 0 : i32
    return %c0_i32, %c0_i32_0 : i32, i32
  }
  func.func @transform_2(%arg0: i32) -> (i32, i32) {
    %c0_i32 = arith.constant 0 : i32
    %c0_i32_0 = arith.constant 0 : i32
    %c0_i32_1 = arith.constant 0 : i32
    return %c0_i32, %c0_i32_0 : i32, i32
  }
  func.func @transform_3(%arg0: i32) -> (i32, i32) {
    %c0_i32 = arith.constant 0 : i32
    %c0_i32_0 = arith.constant 0 : i32
    %c0_i32_1 = arith.constant 0 : i32
    return %c0_i32, %c0_i32_0 : i32, i32
  }
  func.func @transform_4(%arg0: i32) -> (i32, i32) {
    %c0_i32 = arith.constant 0 : i32
    %c0_i32_0 = arith.constant 0 : i32
    %c0_i32_1 = arith.constant 0 : i32
    return %c0_i32, %c0_i32_0 : i32, i32
  }
  func.func @transform_5(%arg0: i32) -> (i32, i32) {
    %c0_i32 = arith.constant 0 : i32
    %c0_i32_0 = arith.constant 0 : i32
    return %arg0, %c0_i32 : i32, i32
  }
}

</mosaic_0001>

<llo_original>
// kernel: tpu_custom_call.1
$region0: #{tpu_custom_call.1}
  #allocation0 [shape = 'u32[]', space=smem, size = 0x4, offset = 0x4, fixed_abs, tag = 'smem constant byte address 0x4 - core index']
  #allocation1 [shape = 'u32[144,128]{1,0:T(1,128)}', space=vmem, size = 0x12000, scoped, tag = 'internal scratch']
  %s0 = inlined_call_operand.hbm [shape: f32[16,128], index: 0, kind: input, shape index: {}]
  %s1 = inlined_call_operand.hbm [shape: f32[128,128], index: 1, kind: input, shape index: {}]
  %s2 = inlined_call_operand.vmem [shape: f32[1,128], index: 2, kind: input, shape index: {}]
  %s3 = inlined_call_operand.hbm [shape: f32[128,128], index: 3, kind: input, shape index: {}]
  %s4 = inlined_call_operand.vmem [shape: f32[1,128], index: 4, kind: input, shape index: {}]
  %s5 = inlined_call_operand.hbm [shape: f32[16,128], index: 5, kind: output, shape index: {}]
  %s6 = sld [smem:[#allocation0]]
  $region65: #{tpu_custom_call.1} parent=0
    _
  %s8 = ssub.s32 1, %s6
  %s9 = scalar_select 0, %s8, %s6
  $region1: #{tpu_custom_call.1} parent=0
    #allocation2 [shape = 'u8[8192]{0}', space=vmem, size = 0x2000, scoped, tag = 'input window, operand 0']
    #allocation3 [shape = 's32[2]{0}', space=sflag, size = 0x8, scoped, tag = 'scoped memory for tpu_custom_call.1']
    #allocation4 [shape = 's32[2]{0}', space=sflag, size = 0x8, scoped, tag = 'scoped memory for tpu_custom_call.1']
    #allocation5 [shape = 'u8[65536]{0}', space=vmem, size = 0x10000, scoped, tag = 'input window, operand 1, single buffered']
    #allocation6 [shape = 's32[1]{0}', space=sflag, size = 0x4, scoped, tag = 'scoped memory for tpu_custom_call.1']
    #allocation7 [shape = 'u8[65536]{0}', space=vmem, size = 0x10000, scoped, tag = 'input window, operand 3, single buffered']
    #allocation8 [shape = 'u8[8192]{0}', space=vmem, size = 0x2000, scoped, tag = 'output window, operand 0']
    %10 = vsyncpa [#allocation3], 0
    %s11 = scalar_lea.sflag [#allocation3], 1
    %12 = vsyncpa %s11, 0
    %13 = vsyncpa [#allocation6], 0
    %14 = vsyncpa [#allocation4], 0
    %s15 = scalar_lea.sflag [#allocation4], 1
    %16 = vsyncpa %s15, 0
    loop: start=0, step=1, limit=4
    $region2: #{tpu_custom_call.1} parent=1 // loop_pre_header
      _
    $region3: #{tpu_custom_call.1} parent=1 // loop_header
      %s18 = sphi 0, %s22
      %p19 = scmp.ge.s32.totalorder %s18, 4
      %s28 = sphi 0, %s30
      %s31 = sphi 0, %s28
      %s32 = sphi 0, %s31
      %s48 = sphi 0, %s32
      %s52 = sphi 0, %s52
      %s54 = sphi 0, %s52
      %s55 = sphi 0, %s54
      %s69 = sphi 0, %s55
      %s73 = sphi 0, %s73
      %s75 = sphi 0, %s73
      %s76 = sphi 0, %s75
      %s90 = sphi 0, %s76
      %s94 = sphi 0, %s94
      %s96 = sphi 0, %s94
      %s97 = sphi 0, %s96
      %s111 = sphi 0, %s97
      %s115 = sphi 0, %s115
      %s117 = sphi 0, %s115
      %s118 = sphi 0, %s117
      %s132 = sphi 0, %s118
      %s138 = sphi 0, %s140
      %s141 = sphi 0, %s138
      %s142 = sphi 0, %s141
      %s158 = sphi 0, %s142
    $region4: #{tpu_custom_call.1} parent=1 // loop_header_branch
      %21 = sbr.rel (%p19) target = $region8
    $region5: #{tpu_custom_call.1} parent=1 // loop_body
      %s23 = ssub.s32 %s18, 1
      %s24 = ssub.s32 %s18, 2
      %s25 = sadd.s32 %s18, 1
      %s26 = ssub.s32 %s18, %s25
      %p27 = scmp.eq.s32.totalorder %s26, 0
      %s29 = sadd.s32 %s28, 1
      %s30 = scalar_select %p27, %s28, %s29
      %p33 = pneg %p27
      %p34 = scmp.eq.s32.totalorder %s18, 1
      %p35 = por %p33, %p34
      %p36 = scmp.ne.s32.totalorder %s28, %s31
      %p37 = scmp.eq.s32.totalorder %s18, 0
      %p38 = por %p36, %p37
      %p39 = scmp.ne.s32.totalorder %s28, %s31
      %p40 = scmp.eq.s32.totalorder %s23, 1
      %p41 = por %p39, %p40
      %p42 = scmp.ne.s32.totalorder %s31, %s32
      %p43 = scmp.eq.s32.totalorder %s23, 0
      %p44 = por %p42, %p43
      %p45 = scmp.ne.s32.totalorder %s31, %s32
      %p46 = scmp.eq.s32.totalorder %s24, 1
      %p47 = por %p45, %p46
      %p49 = scmp.ne.s32.totalorder %s32, %s48
      %p50 = scmp.eq.s32.totalorder %s24, 0
      %p51 = por %p49, %p50
      %s53 = sadd.s32 %s52, 1
      %p56 = scmp.eq.s32.totalorder %s18, 1
      %p57 = scmp.ne.s32.totalorder %s52, %s54
      %p58 = scmp.eq.s32.totalorder %s18, 0
      %p59 = por %p57, %p58
      %p60 = scmp.ne.s32.totalorder %s52, %s54
      %p61 = scmp.eq.s32.totalorder %s23, 1
      %p62 = por %p60, %p61
      %p63 = scmp.ne.s32.totalorder %s54, %s55
      %p64 = scmp.eq.s32.totalorder %s23, 0
      %p65 = por %p63, %p64
      %p66 = scmp.ne.s32.totalorder %s54, %s55
      %p67 = scmp.eq.s32.totalorder %s24, 1
      %p68 = por %p66, %p67
      %p70 = scmp.ne.s32.totalorder %s55, %s69
      %p71 = scmp.eq.s32.totalorder %s24, 0
      %p72 = por %p70, %p71
      %s74 = sadd.s32 %s73, 1
      %p77 = scmp.eq.s32.totalorder %s18, 1
      %p78 = scmp.ne.s32.totalorder %s73, %s75
      %p79 = scmp.eq.s32.totalorder %s18, 0
      %p80 = por %p78, %p79
      %p81 = scmp.ne.s32.totalorder %s73, %s75
      %p82 = scmp.eq.s32.totalorder %s23, 1
      %p83 = por %p81, %p82
      %p84 = scmp.ne.s32.totalorder %s75, %s76
      %p85 = scmp.eq.s32.totalorder %s23, 0
      %p86 = por %p84, %p85
      %p87 = scmp.ne.s32.totalorder %s75, %s76
      %p88 = scmp.eq.s32.totalorder %s24, 1
      %p89 = por %p87, %p88
      %p91 = scmp.ne.s32.totalorder %s76, %s90
      %p92 = scmp.eq.s32.totalorder %s24, 0
      %p93 = por %p91, %p92
      %s95 = sadd.s32 %s94, 1
      %p98 = scmp.eq.s32.totalorder %s18, 1
      %p99 = scmp.ne.s32.totalorder %s94, %s96
      %p100 = scmp.eq.s32.totalorder %s18, 0
      %p101 = por %p99, %p100
      %p102 = scmp.ne.s32.totalorder %s94, %s96
      %p103 = scmp.eq.s32.totalorder %s23, 1
      %p104 = por %p102, %p103
      %p105 = scmp.ne.s32.totalorder %s96, %s97
      %p106 = scmp.eq.s32.totalorder %s23, 0
      %p107 = por %p105, %p106
      %p108 = scmp.ne.s32.totalorder %s96, %s97
      %p109 = scmp.eq.s32.totalorder %s24, 1
      %p110 = por %p108, %p109
      %p112 = scmp.ne.s32.totalorder %s97, %s111
      %p113 = scmp.eq.s32.totalorder %s24, 0
      %p114 = por %p112, %p113
      %s116 = sadd.s32 %s115, 1
      %p119 = scmp.eq.s32.totalorder %s18, 1
      %p120 = scmp.ne.s32.totalorder %s115, %s117
      %p121 = scmp.eq.s32.totalorder %s18, 0
      %p122 = por %p120, %p121
      %p123 = scmp.ne.s32.totalorder %s115, %s117
      %p124 = scmp.eq.s32.totalorder %s23, 1
      %p125 = por %p123, %p124
      %p126 = scmp.ne.s32.totalorder %s117, %s118
      %p127 = scmp.eq.s32.totalorder %s23, 0
      %p128 = por %p126, %p127
      %p129 = scmp.ne.s32.totalorder %s117, %s118
      %p130 = scmp.eq.s32.totalorder %s24, 1
      %p131 = por %p129, %p130
      %p133 = scmp.ne.s32.totalorder %s118, %s132
      %p134 = scmp.eq.s32.totalorder %s24, 0
      %p135 = por %p133, %p134
      %s136 = ssub.s32 %s18, %s25
      %p137 = scmp.eq.s32.totalorder %s136, 0
      %s139 = sadd.s32 %s138, 1
      %s140 = scalar_select %p137, %s138, %s139
      %p143 = pneg %p137
      %p144 = scmp.eq.s32.totalorder %s18, 1
      %p145 = por %p143, %p144
      %p146 = scmp.ne.s32.totalorder %s138, %s141
      %p147 = scmp.eq.s32.totalorder %s18, 0
      %p148 = por %p146, %p147
      %p149 = scmp.ne.s32.totalorder %s138, %s141
      %p150 = scmp.eq.s32.totalorder %s23, 1
      %p151 = por %p149, %p150
      %p152 = scmp.ne.s32.totalorder %s141, %s142
      %p153 = scmp.eq.s32.totalorder %s23, 0
      %p154 = por %p152, %p153
      %p155 = scmp.ne.s32.totalorder %s141, %s142
      %p156 = scmp.eq.s32.totalorder %s24, 1
      %p157 = por %p155, %p156
      %p159 = scmp.ne.s32.totalorder %s142, %s158
      %p160 = scmp.eq.s32.totalorder %s24, 0
      %p161 = por %p159, %p160
      %p162 = scmp.le.s32.totalorder 1, %s18
      %p163 = scmp.lt.s32.totalorder %s18, 3
      %p164 = pnand %p162, %p163
      %p165 = pneg %p164
      // Predicated region
      $region9: #{tpu_custom_call.1} parent=5 // pred_check
        _
      $region10: #{tpu_custom_call.1} parent=5 // pred_check_branch
        %167 = sbr.rel (%p164) target = $region12
      $region11: #{tpu_custom_call.1} parent=5 // pred_region
        %s168 = ssub.s32 %s18, 1
        // Predicated region
        $region13: #{tpu_custom_call.1} parent=11 // pred_check
          %p169 = pneg %p65
        $region14: #{tpu_custom_call.1} parent=11 // pred_check_branch
          %171 = sbr.rel (%p169) target = $region16
        $region15: #{tpu_custom_call.1} parent=11 // pred_region
          %s173 = ssub.s32 2048, 2048
          %174 = vsyncadd [#allocation6], %s173
          %s175 = sshll.u32 [#allocation5], 4
          %s176 = int_to_ptr.vmem [resolvable:$true] %s175
          %181 = dma.hbm_to_vmem [thread:$0]  %s1, 2048, %s176, [#allocation6], 128, 128, 8
        $region16: #{tpu_custom_call.1} parent=11 // pred_fallthru
          _
        // Predicated region
        $region17: #{tpu_custom_call.1} parent=11 // pred_check
          %p182 = pneg %p86
        $region18: #{tpu_custom_call.1} parent=11 // pred_check_branch
          %184 = sbr.rel (%p182) target = $region20
        $region19: #{tpu_custom_call.1} parent=11 // pred_region
          _
        $region20: #{tpu_custom_call.1} parent=11 // pred_fallthru
          _
        // Predicated region
        $region21: #{tpu_custom_call.1} parent=11 // pred_check
          %p185 = pneg %p107
        $region22: #{tpu_custom_call.1} parent=11 // pred_check_branch
          %187 = sbr.rel (%p185) target = $region24
        $region23: #{tpu_custom_call.1} parent=11 // pred_region
          %s189 = ssub.s32 2048, 2048
          %190 = vsyncadd [#allocation6], %s189
          %s191 = sshll.u32 [#allocation7], 4
          %s192 = int_to_ptr.vmem [resolvable:$true] %s191
          %197 = dma.hbm_to_vmem [thread:$0]  %s3, 2048, %s192, [#allocation6], 128, 128, 8
        $region24: #{tpu_custom_call.1} parent=11 // pred_fallthru
          _
        // Predicated region
        $region25: #{tpu_custom_call.1} parent=11 // pred_check
          %p198 = pneg %p128
        $region26: #{tpu_custom_call.1} parent=11 // pred_check_branch
          %200 = sbr.rel (%p198) target = $region28
        $region27: #{tpu_custom_call.1} parent=11 // pred_region
          _
        $region28: #{tpu_custom_call.1} parent=11 // pred_fallthru
          _
      $region12: #{tpu_custom_call.1} parent=5 // pred_fallthru
        _
      %p201 = scmp.lt.s32.totalorder %s18, 2
      // Predicated region
      $region29: #{tpu_custom_call.1} parent=5 // pred_check
        %p202 = pneg %p201
      $region30: #{tpu_custom_call.1} parent=5 // pred_check_branch
        %204 = sbr.rel (%p202) target = $region32
      $region31: #{tpu_custom_call.1} parent=5 // pred_region
        // Predicated region
        $region33: #{tpu_custom_call.1} parent=31 // pred_check
          %p205 = pneg %p38
        $region34: #{tpu_custom_call.1} parent=31 // pred_check_branch
          %207 = sbr.rel (%p205) target = $region36
        $region35: #{tpu_custom_call.1} parent=31 // pred_region
          %s208 = sand.u32 %s28, 1
          %s209 = scalar_lea.sflag [#allocation3], %s208
          %s210 = sand.u32 %s28, 1
          %s211 = smul.addr %s210, 8
          %s212 = scalar_lea.vmem [#allocation2], %s211
          %s214 = ssub.s32 128, 128
          %215 = vsyncadd %s209, %s214
          %s216 = smul.addr %s18, 128
          %s217 = scalar_lea.hbm %s0, %s216
          %s219 = sshll.u32 %s212, 4
          %s220 = int_to_ptr.vmem [resolvable:$true] %s219
          %222 = dma.hbm_to_vmem [thread:$0]  %s217, 128, %s220, %s209
        $region36: #{tpu_custom_call.1} parent=31 // pred_fallthru
          _
      $region32: #{tpu_custom_call.1} parent=5 // pred_fallthru
        _
      %p223 = scmp.le.s32.totalorder 1, %s18
      %p224 = scmp.lt.s32.totalorder %s18, 3
      %p225 = pnand %p223, %p224
      %p226 = pneg %p225
      // Predicated region
      $region37: #{tpu_custom_call.1} parent=5 // pred_check
        _
      $region38: #{tpu_custom_call.1} parent=5 // pred_check_branch
        %228 = sbr.rel (%p225) target = $region40
      $region39: #{tpu_custom_call.1} parent=5 // pred_region
        %s229 = ssub.s32 %s18, 1
        %s230 = sand.u32 %s31, 1
        %s231 = scalar_lea.sflag [#allocation3], %s230
        %s232 = sand.u32 %s31, 1
        %s233 = smul.addr %s232, 8
        %s234 = scalar_lea.vmem [#allocation2], %s233
        // Predicated region
        $region41: #{tpu_custom_call.1} parent=39 // pred_check
          %p235 = pneg %p44
        $region42: #{tpu_custom_call.1} parent=39 // pred_check_branch
          %237 = sbr.rel (%p235) target = $region44
        $region43: #{tpu_custom_call.1} parent=39 // pred_region
          %238 = dma.done %s231, 128
        $region44: #{tpu_custom_call.1} parent=39 // pred_fallthru
          _
        // Predicated region
        $region45: #{tpu_custom_call.1} parent=39 // pred_check
          %p239 = pneg %p65
        $region46: #{tpu_custom_call.1} parent=39 // pred_check_branch
          %241 = sbr.rel (%p239) target = $region48
        $region47: #{tpu_custom_call.1} parent=39 // pred_region
          %242 = dma.done [#allocation6], 2048
        $region48: #{tpu_custom_call.1} parent=39 // pred_fallthru
          _
        // Predicated region
        $region49: #{tpu_custom_call.1} parent=39 // pred_check
          %p243 = pneg %p107
        $region50: #{tpu_custom_call.1} parent=39 // pred_check_branch
          %245 = sbr.rel (%p243) target = $region52
        $region51: #{tpu_custom_call.1} parent=39 // pred_region
          %246 = dma.done [#allocation6], 2048
        $region52: #{tpu_custom_call.1} parent=39 // pred_fallthru
          _
        %s247 = sand.u32 %s31, 1
        %s248 = scalar_lea.sflag [#allocation3], %s247
        %s249 = sand.u32 %s31, 1
        %s250 = smul.addr %s249, 8
        %s251 = scalar_lea.vmem [#allocation2], %s250
        %p252 = pneg %p44
        %p253 = pneg %p41
        %p254 = pneg %p65
        %p255 = pneg %p62
        %p256 = pneg %p86
        %p257 = pneg %p83
        %p258 = pneg %p107
        %p259 = pneg %p104
        %p260 = pneg %p128
        %p261 = pneg %p125
        %p262 = pneg %p154
        %p263 = pneg %p151
        %s264 = sand.u32 %s141, 1
        %s265 = scalar_lea.sflag [#allocation4], %s264
        %s266 = sand.u32 %s141, 1
        %s267 = smul.addr %s266, 8
        %s268 = scalar_lea.vmem [#allocation8], %s267
        %v269 = vld [vmem:[%s234] sm:$0xff]
        %v270 = vld [vmem:[#allocation5] sm:$0xff]
        %v271 = vld [vmem:[#allocation5 + $0x8] sm:$0xff]
        %v272 = vld [vmem:[#allocation5 + $0x10] sm:$0xff]
        %v273 = vld [vmem:[#allocation5 + $0x18] sm:$0xff]
        %v274 = vld [vmem:[#allocation5 + $0x20] sm:$0xff]
        %v275 = vld [vmem:[#allocation5 + $0x28] sm:$0xff]
        %v276 = vld [vmem:[#allocation5 + $0x30] sm:$0xff]
        %v277 = vld [vmem:[#allocation5 + $0x38] sm:$0xff]
        %v278 = vld [vmem:[#allocation5 + $0x40] sm:$0xff]
        %v279 = vld [vmem:[#allocation5 + $0x48] sm:$0xff]
        %v280 = vld [vmem:[#allocation5 + $0x50] sm:$0xff]
        %v281 = vld [vmem:[#allocation5 + $0x58] sm:$0xff]
        %v282 = vld [vmem:[#allocation5 + $0x60] sm:$0xff]
        %v283 = vld [vmem:[#allocation5 + $0x68] sm:$0xff]
        %v284 = vld [vmem:[#allocation5 + $0x70] sm:$0xff]
        %v285 = vld [vmem:[#allocation5 + $0x78] sm:$0xff]
        %v286 = vld [vmem:[%s2] sm:$0x1]
        %v288 = vlaneseq
        %v289 = vshrl.u32 %v288, 7
        %v290 = vsub.s32 0, %v289
        %v291 = vrot.slane %v286, %v290
        %293 = vmatprep.subr.mxu0 0.0
        %294 = vmatpush1.msra.mxu0 %v285
        %295 = vmatprep.subr.mxu0 0.0
        %296 = vmatpush1.msra.mxu0 %v284
        %297 = vmatprep.subr.mxu0 0.0
        %298 = vmatpush1.msra.mxu0 %v283
        %299 = vmatprep.subr.mxu0 0.0
        %300 = vmatpush1.msra.mxu0 %v282
        %301 = vmatprep.subr.mxu0 0.0
        %302 = vmatpush1.msra.mxu0 %v281
        %303 = vmatprep.subr.mxu0 0.0
        %304 = vmatpush1.msra.mxu0 %v280
        %305 = vmatprep.subr.mxu0 0.0
        %306 = vmatpush1.msra.mxu0 %v279
        %307 = vmatprep.subr.mxu0 0.0
        %308 = vmatpush1.msra.mxu0 %v278
        %309 = vmatprep.subr.mxu0 0.0
        %310 = vmatpush1.msra.mxu0 %v277
        %311 = vmatprep.subr.mxu0 0.0
        %312 = vmatpush1.msra.mxu0 %v276
        %313 = vmatprep.subr.mxu0 0.0
        %314 = vmatpush1.msra.mxu0 %v275
        %315 = vmatprep.subr.mxu0 0.0
        %316 = vmatpush1.msra.mxu0 %v274
        %317 = vmatprep.subr.mxu0 0.0
        %318 = vmatpush1.msra.mxu0 %v273
        %319 = vmatprep.subr.mxu0 0.0
        %320 = vmatpush1.msra.mxu0 %v272
        %321 = vmatprep.subr.mxu0 0.0
        %322 = vmatpush1.msra.mxu0 %v271
        %323 = vmatprep.subr.mxu0 0.0
        %324 = vmatpush1.msra.mxu0 %v270
        %325 = vmatprep.subr.mxu0 0.0
        %326 = vmatpush2.msra.mxu0 0.0
        %327 = vmatprep.subr.mxu0 0.0
        %328 = vmatpush2.msra.mxu0 0.0
        %329 = vmatprep.subr.mxu0 0.0
        %330 = vmatpush2.msra.mxu0 0.0
        %331 = vmatprep.subr.mxu0 0.0
        %332 = vmatpush2.msra.mxu0 0.0
        %333 = vmatprep.subr.mxu0 0.0
        %334 = vmatpush2.msra.mxu0 0.0
        %335 = vmatprep.subr.mxu0 0.0
        %336 = vmatpush2.msra.mxu0 0.0
        %337 = vmatprep.subr.mxu0 0.0
        %338 = vmatpush2.msra.mxu0 0.0
        %339 = vmatprep.subr.mxu0 0.0
        %340 = vmatpush2.msra.mxu0 0.0
        %341 = vmatprep.subr.mxu0 0.0
        %342 = vmatpush2.msra.mxu0 0.0
        %343 = vmatprep.subr.mxu0 0.0
        %344 = vmatpush2.msra.mxu0 0.0
        %345 = vmatprep.subr.mxu0 0.0
        %346 = vmatpush2.msra.mxu0 0.0
        %347 = vmatprep.subr.mxu0 0.0
        %348 = vmatpush2.msra.mxu0 0.0
        %349 = vmatprep.subr.mxu0 0.0
        %350 = vmatpush2.msra.mxu0 0.0
        %351 = vmatprep.subr.mxu0 0.0
        %352 = vmatpush2.msra.mxu0 0.0
        %353 = vmatprep.subr.mxu0 0.0
        %354 = vmatpush2.msra.mxu0 0.0
        %355 = vmatprep.subr.mxu0 0.0
        %356 = vmatpush2.msra.mxu0 0.0
        %357 = vmatprep.mubr.f32.mxu0 0.0
        %358 = vmatmul.mubr.f32.gmra.mxu0 %v269
        %v359 = vpop.f32.mrf.mxu0
        %v360 = vadd.f32 %v291, %v359
        %v361 = vpop.f32.mrf.mxu0
        %362 = vdwg.mxu0
        %v363 = vmul.f32 %v360, 0.5
        %v364 = vmul.f32 %v360, 0.70710677
        %v365 = verf.f32.pop %v364
        %v366 = vadd.f32 %v365, 1.0
        %v367 = vmul.f32 %v363, %v366
        %v368 = vld [vmem:[#allocation7] sm:$0xff]
        %v369 = vld [vmem:[#allocation7 + $0x8] sm:$0xff]
        %v370 = vld [vmem:[#allocation7 + $0x10] sm:$0xff]
        %v371 = vld [vmem:[#allocation7 + $0x18] sm:$0xff]
        %v372 = vld [vmem:[#allocation7 + $0x20] sm:$0xff]
        %v373 = vld [vmem:[#allocation7 + $0x28] sm:$0xff]
        %v374 = vld [vmem:[#allocation7 + $0x30] sm:$0xff]
        %v375 = vld [vmem:[#allocation7 + $0x38] sm:$0xff]
        %v376 = vld [vmem:[#allocation7 + $0x40] sm:$0xff]
        %v377 = vld [vmem:[#allocation7 + $0x48] sm:$0xff]
        %v378 = vld [vmem:[#allocation7 + $0x50] sm:$0xff]
        %v379 = vld [vmem:[#allocation7 + $0x58] sm:$0xff]
        %v380 = vld [vmem:[#allocation7 + $0x60] sm:$0xff]
        %v381 = vld [vmem:[#allocation7 + $0x68] sm:$0xff]
        %v382 = vld [vmem:[#allocation7 + $0x70] sm:$0xff]
        %v383 = vld [vmem:[#allocation7 + $0x78] sm:$0xff]
        %v384 = vld [vmem:[%s4] sm:$0x1]
        %v386 = vlaneseq
        %v387 = vshrl.u32 %v386, 7
        %v388 = vsub.s32 0, %v387
        %v389 = vrot.slane %v384, %v388
        %391 = vmatprep.subr.mxu0 0.0
        %392 = vmatpush1.msra.mxu0 %v383
        %393 = vmatprep.subr.mxu0 0.0
        %394 = vmatpush1.msra.mxu0 %v382
        %395 = vmatprep.subr.mxu0 0.0
        %396 = vmatpush1.msra.mxu0 %v381
        %397 = vmatprep.subr.mxu0 0.0
        %398 = vmatpush1.msra.mxu0 %v380
        %399 = vmatprep.subr.mxu0 0.0
        %400 = vmatpush1.msra.mxu0 %v379
        %401 = vmatprep.subr.mxu0 0.0
        %402 = vmatpush1.msra.mxu0 %v378
        %403 = vmatprep.subr.mxu0 0.0
        %404 = vmatpush1.msra.mxu0 %v377
        %405 = vmatprep.subr.mxu0 0.0
        %406 = vmatpush1.msra.mxu0 %v376
        %407 = vmatprep.subr.mxu0 0.0
        %408 = vmatpush1.msra.mxu0 %v375
        %409 = vmatprep.subr.mxu0 0.0
        %410 = vmatpush1.msra.mxu0 %v374
        %411 = vmatprep.subr.mxu0 0.0
        %412 = vmatpush1.msra.mxu0 %v373
        %413 = vmatprep.subr.mxu0 0.0
        %414 = vmatpush1.msra.mxu0 %v372
        %415 = vmatprep.subr.mxu0 0.0
        %416 = vmatpush1.msra.mxu0 %v371
        %417 = vmatprep.subr.mxu0 0.0
        %418 = vmatpush1.msra.mxu0 %v370
        %419 = vmatprep.subr.mxu0 0.0
        %420 = vmatpush1.msra.mxu0 %v369
        %421 = vmatprep.subr.mxu0 0.0
        %422 = vmatpush1.msra.mxu0 %v368
        %423 = vmatprep.subr.mxu0 0.0
        %424 = vmatpush2.msra.mxu0 0.0
        %425 = vmatprep.subr.mxu0 0.0
        %426 = vmatpush2.msra.mxu0 0.0
        %427 = vmatprep.subr.mxu0 0.0
        %428 = vmatpush2.msra.mxu0 0.0
        %429 = vmatprep.subr.mxu0 0.0
        %430 = vmatpush2.msra.mxu0 0.0
        %431 = vmatprep.subr.mxu0 0.0
        %432 = vmatpush2.msra.mxu0 0.0
        %433 = vmatprep.subr.mxu0 0.0
        %434 = vmatpush2.msra.mxu0 0.0
        %435 = vmatprep.subr.mxu0 0.0
        %436 = vmatpush2.msra.mxu0 0.0
        %437 = vmatprep.subr.mxu0 0.0
        %438 = vmatpush2.msra.mxu0 0.0
        %439 = vmatprep.subr.mxu0 0.0
        %440 = vmatpush2.msra.mxu0 0.0
        %441 = vmatprep.subr.mxu0 0.0
        %442 = vmatpush2.msra.mxu0 0.0
        %443 = vmatprep.subr.mxu0 0.0
        %444 = vmatpush2.msra.mxu0 0.0
        %445 = vmatprep.subr.mxu0 0.0
        %446 = vmatpush2.msra.mxu0 0.0
        %447 = vmatprep.subr.mxu0 0.0
        %448 = vmatpush2.msra.mxu0 0.0
        %449 = vmatprep.subr.mxu0 0.0
        %450 = vmatpush2.msra.mxu0 0.0
        %451 = vmatprep.subr.mxu0 0.0
        %452 = vmatpush2.msra.mxu0 0.0
        %453 = vmatprep.subr.mxu0 0.0
        %454 = vmatpush2.msra.mxu0 0.0
        %455 = vmatprep.mubr.f32.mxu0 0.0
        %456 = vmatmul.mubr.f32.gmra.mxu0 %v367
        %v457 = vpop.f32.mrf.mxu0
        %v458 = vadd.f32 %v389, %v457
        %v459 = vpop.f32.mrf.mxu0
        %460 = vdwg.mxu0
        %461 = vst [vmem:[%s268] sm:$0xff] %v458
        %s462 = sand.u32 %s141, 1
        %s463 = scalar_lea.sflag [#allocation4], %s462
        %s464 = sand.u32 %s141, 1
        %s465 = smul.addr %s464, 8
        %s466 = scalar_lea.vmem [#allocation8], %s465
        // Predicated region
        $region53: #{tpu_custom_call.1} parent=39 // pred_check
          %p467 = pneg %p151
        $region54: #{tpu_custom_call.1} parent=39 // pred_check_branch
          %469 = sbr.rel (%p467) target = $region56
        $region55: #{tpu_custom_call.1} parent=39 // pred_region
          %s471 = ssub.s32 128, 128
          %472 = vsyncadd %s463, %s471
          %s473 = smul.addr %s23, 128
          %s474 = scalar_lea.hbm %s5, %s473
          %s476 = sshll.u32 %s466, 4
          %s477 = int_to_ptr.vmem [resolvable:$true] %s476
          %479 = dma.vmem_to_hbm [thread:$0]  %s477, 128, %s474, %s463
        $region56: #{tpu_custom_call.1} parent=39 // pred_fallthru
          _
      $region40: #{tpu_custom_call.1} parent=5 // pred_fallthru
        _
      %p480 = scmp.le.s32.totalorder 2, %s18
      // Predicated region
      $region57: #{tpu_custom_call.1} parent=5 // pred_check
        %p481 = pneg %p480
      $region58: #{tpu_custom_call.1} parent=5 // pred_check_branch
        %483 = sbr.rel (%p481) target = $region60
      $region59: #{tpu_custom_call.1} parent=5 // pred_region
        %s484 = ssub.s32 %s18, 2
        // Predicated region
        $region61: #{tpu_custom_call.1} parent=59 // pred_check
          %p485 = pneg %p157
        $region62: #{tpu_custom_call.1} parent=59 // pred_check_branch
          %487 = sbr.rel (%p485) target = $region64
        $region63: #{tpu_custom_call.1} parent=59 // pred_region
          %s488 = sand.u32 %s142, 1
          %s489 = scalar_lea.sflag [#allocation4], %s488
          %s490 = sand.u32 %s142, 1
          %s491 = smul.addr %s490, 8
          %s492 = scalar_lea.vmem [#allocation8], %s491
          %493 = dma.done %s489, 128
        $region64: #{tpu_custom_call.1} parent=59 // pred_fallthru
          _
      $region60: #{tpu_custom_call.1} parent=5 // pred_fallthru
        _
    $region6: #{tpu_custom_call.1} parent=1 // loop_footer
      %s22 = sadd.s32 1, %s18
    $region7: #{tpu_custom_call.1} parent=1 // loop_footer_branch
      %17 = sbr.rel target = $region3
    $region8: #{tpu_custom_call.1} parent=1 // loop_exit
      _
    %494 = vsyncpa [#allocation3], 1
    %s495 = scalar_lea.sflag [#allocation3], 1
    %496 = vsyncpa %s495, 1
    %497 = vsyncpa [#allocation6], 1
    %498 = vsyncpa [#allocation4], 1
    %s499 = scalar_lea.sflag [#allocation4], 1
    %500 = vsyncpa %s499, 1

// kernel: tpu_custom_call.1
$region0: #{tpu_custom_call.1}
  #allocation0 [shape = 'u32[]', space=smem, size = 0x4, offset = 0x4, fixed_abs, tag = 'smem constant byte address 0x4 - core index']
  #allocation1 [shape = 'u32[144,128]{1,0:T(1,128)}', space=vmem, size = 0x12000, scoped, tag = 'internal scratch']
  %s0 = inlined_call_operand.hbm [shape: f32[16,128], index: 0, kind: input, shape index: {}]
  %s1 = inlined_call_operand.hbm [shape: f32[128,128], index: 1, kind: input, shape index: {}]
  %s2 = inlined_call_operand.vmem [shape: f32[1,128], index: 2, kind: input, shape index: {}]
  %s3 = inlined_call_operand.hbm [shape: f32[128,128], index: 3, kind: input, shape index: {}]
  %s4 = inlined_call_operand.vmem [shape: f32[1,128], index: 4, kind: input, shape index: {}]
  %s5 = inlined_call_operand.hbm [shape: f32[16,128], index: 5, kind: output, shape index: {}]
  %s6 = sld [smem:[#allocation0]]
  $region65: #{tpu_custom_call.1} parent=0
    _
  %s8 = ssub.s32 1, %s6
  %s9 = scalar_select 0, %s8, %s6
  $region1: #{tpu_custom_call.1} parent=0
    #allocation2 [shape = 'u8[8192]{0}', space=vmem, size = 0x2000, scoped, tag = 'input window, operand 0']
    #allocation3 [shape = 's32[2]{0}', space=sflag, size = 0x8, scoped, tag = 'scoped memory for tpu_custom_call.1']
    #allocation4 [shape = 's32[2]{0}', space=sflag, size = 0x8, scoped, tag = 'scoped memory for tpu_custom_call.1']
    #allocation5 [shape = 'u8[65536]{0}', space=vmem, size = 0x10000, scoped, tag = 'input window, operand 1, single buffered']
    #allocation6 [shape = 's32[1]{0}', space=sflag, size = 0x4, scoped, tag = 'scoped memory for tpu_custom_call.1']
    #allocation7 [shape = 'u8[65536]{0}', space=vmem, size = 0x10000, scoped, tag = 'input window, operand 3, single buffered']
    #allocation8 [shape = 'u8[8192]{0}', space=vmem, size = 0x2000, scoped, tag = 'output window, operand 0']
    %10 = vsyncpa [#allocation3], 0
    %s11 = scalar_lea.sflag [#allocation3], 1
    %12 = vsyncpa %s11, 0
    %13 = vsyncpa [#allocation6], 0
    %14 = vsyncpa [#allocation4], 0
    %s15 = scalar_lea.sflag [#allocation4], 1
    %16 = vsyncpa %s15, 0
    loop: start=0, step=1, limit=4
    $region2: #{tpu_custom_call.1} parent=1 // loop_pre_header
      _
    $region3: #{tpu_custom_call.1} parent=1 // loop_header
      %s18 = sphi 0, %s22
      %p19 = scmp.ge.s32.totalorder %s18, 4
      %s28 = sphi 0, %s30
      %s31 = sphi 0, %s28
      %s32 = sphi 0, %s31
      %s48 = sphi 0, %s32
      %s52 = sphi 0, %s52
      %s54 = sphi 0, %s52
      %s55 = sphi 0, %s54
      %s69 = sphi 0, %s55
      %s73 = sphi 0, %s73
      %s75 = sphi 0, %s73
      %s76 = sphi 0, %s75
      %s90 = sphi 0, %s76
      %s94 = sphi 0, %s94
      %s96 = sphi 0, %s94
      %s97 = sphi 0, %s96
      %s111 = sphi 0, %s97
      %s115 = sphi 0, %s115
      %s117 = sphi 0, %s115
      %s118 = sphi 0, %s117
      %s132 = sphi 0, %s118
      %s138 = sphi 0, %s140
      %s141 = sphi 0, %s138
      %s142 = sphi 0, %s141
      %s158 = sphi 0, %s142
    $region4: #{tpu_custom_call.1} parent=1 // loop_header_branch
      %21 = sbr.rel (%p19) target = $region8
    $region5: #{tpu_custom_call.1} parent=1 // loop_body
      %s23 = ssub.s32 %s18, 1
      %s24 = ssub.s32 %s18, 2
      %s25 = sadd.s32 %s18, 1
      %s26 = ssub.s32 %s18, %s25
      %p27 = scmp.eq.s32.totalorder %s26, 0
      %s29 = sadd.s32 %s28, 1
      %s30 = scalar_select %p27, %s28, %s29
      %p33 = pneg %p27
      %p34 = scmp.eq.s32.totalorder %s18, 1
      %p35 = por %p33, %p34
      %p36 = scmp.ne.s32.totalorder %s28, %s31
      %p37 = scmp.eq.s32.totalorder %s18, 0
      %p38 = por %p36, %p37
      %p39 = scmp.ne.s32.totalorder %s28, %s31
      %p40 = scmp.eq.s32.totalorder %s23, 1
      %p41 = por %p39, %p40
      %p42 = scmp.ne.s32.totalorder %s31, %s32
      %p43 = scmp.eq.s32.totalorder %s23, 0
      %p44 = por %p42, %p43
      %p45 = scmp.ne.s32.totalorder %s31, %s32
      %p46 = scmp.eq.s32.totalorder %s24, 1
      %p47 = por %p45, %p46
      %p49 = scmp.ne.s32.totalorder %s32, %s48
      %p50 = scmp.eq.s32.totalorder %s24, 0
      %p51 = por %p49, %p50
      %s53 = sadd.s32 %s52, 1
      %p56 = scmp.eq.s32.totalorder %s18, 1
      %p57 = scmp.ne.s32.totalorder %s52, %s54
      %p58 = scmp.eq.s32.totalorder %s18, 0
      %p59 = por %p57, %p58
      %p60 = scmp.ne.s32.totalorder %s52, %s54
      %p61 = scmp.eq.s32.totalorder %s23, 1
      %p62 = por %p60, %p61
      %p63 = scmp.ne.s32.totalorder %s54, %s55
      %p64 = scmp.eq.s32.totalorder %s23, 0
      %p65 = por %p63, %p64
      %p66 = scmp.ne.s32.totalorder %s54, %s55
      %p67 = scmp.eq.s32.totalorder %s24, 1
      %p68 = por %p66, %p67
      %p70 = scmp.ne.s32.totalorder %s55, %s69
      %p71 = scmp.eq.s32.totalorder %s24, 0
      %p72 = por %p70, %p71
      %s74 = sadd.s32 %s73, 1
      %p77 = scmp.eq.s32.totalorder %s18, 1
      %p78 = scmp.ne.s32.totalorder %s73, %s75
      %p79 = scmp.eq.s32.totalorder %s18, 0
      %p80 = por %p78, %p79
      %p81 = scmp.ne.s32.totalorder %s73, %s75
      %p82 = scmp.eq.s32.totalorder %s23, 1
      %p83 = por %p81, %p82
      %p84 = scmp.ne.s32.totalorder %s75, %s76
      %p85 = scmp.eq.s32.totalorder %s23, 0
      %p86 = por %p84, %p85
      %p87 = scmp.ne.s32.totalorder %s75, %s76
      %p88 = scmp.eq.s32.totalorder %s24, 1
      %p89 = por %p87, %p88
      %p91 = scmp.ne.s32.totalorder %s76, %s90
      %p92 = scmp.eq.s32.totalorder %s24, 0
      %p93 = por %p91, %p92
      %s95 = sadd.s32 %s94, 1
      %p98 = scmp.eq.s32.totalorder %s18, 1
      %p99 = scmp.ne.s32.totalorder %s94, %s96
      %p100 = scmp.eq.s32.totalorder %s18, 0
      %p101 = por %p99, %p100
      %p102 = scmp.ne.s32.totalorder %s94, %s96
      %p103 = scmp.eq.s32.totalorder %s23, 1
      %p104 = por %p102, %p103
      %p105 = scmp.ne.s32.totalorder %s96, %s97
      %p106 = scmp.eq.s32.totalorder %s23, 0
      %p107 = por %p105, %p106
      %p108 = scmp.ne.s32.totalorder %s96, %s97
      %p109 = scmp.eq.s32.totalorder %s24, 1
      %p110 = por %p108, %p109
      %p112 = scmp.ne.s32.totalorder %s97, %s111
      %p113 = scmp.eq.s32.totalorder %s24, 0
      %p114 = por %p112, %p113
      %s116 = sadd.s32 %s115, 1
      %p119 = scmp.eq.s32.totalorder %s18, 1
      %p120 = scmp.ne.s32.totalorder %s115, %s117
      %p121 = scmp.eq.s32.totalorder %s18, 0
      %p122 = por %p120, %p121
      %p123 = scmp.ne.s32.totalorder %s115, %s117
      %p124 = scmp.eq.s32.totalorder %s23, 1
      %p125 = por %p123, %p124
      %p126 = scmp.ne.s32.totalorder %s117, %s118
      %p127 = scmp.eq.s32.totalorder %s23, 0
      %p128 = por %p126, %p127
      %p129 = scmp.ne.s32.totalorder %s117, %s118
      %p130 = scmp.eq.s32.totalorder %s24, 1
      %p131 = por %p129, %p130
      %p133 = scmp.ne.s32.totalorder %s118, %s132
      %p134 = scmp.eq.s32.totalorder %s24, 0
      %p135 = por %p133, %p134
      %s136 = ssub.s32 %s18, %s25
      %p137 = scmp.eq.s32.totalorder %s136, 0
      %s139 = sadd.s32 %s138, 1
      %s140 = scalar_select %p137, %s138, %s139
      %p143 = pneg %p137
      %p144 = scmp.eq.s32.totalorder %s18, 1
      %p145 = por %p143, %p144
      %p146 = scmp.ne.s32.totalorder %s138, %s141
      %p147 = scmp.eq.s32.totalorder %s18, 0
      %p148 = por %p146, %p147
      %p149 = scmp.ne.s32.totalorder %s138, %s141
      %p150 = scmp.eq.s32.totalorder %s23, 1
      %p151 = por %p149, %p150
      %p152 = scmp.ne.s32.totalorder %s141, %s142
      %p153 = scmp.eq.s32.totalorder %s23, 0
      %p154 = por %p152, %p153
      %p155 = scmp.ne.s32.totalorder %s141, %s142
      %p156 = scmp.eq.s32.totalorder %s24, 1
      %p157 = por %p155, %p156
      %p159 = scmp.ne.s32.totalorder %s142, %s158
      %p160 = scmp.eq.s32.totalorder %s24, 0
      %p161 = por %p159, %p160
      %p162 = scmp.le.s32.totalorder 1, %s18
      %p163 = scmp.lt.s32.totalorder %s18, 3
      %p164 = pnand %p162, %p163
      %p165 = pneg %p164
      // Predicated region
      $region9: #{tpu_custom_call.1} parent=5 // pred_check
        _
      $region10: #{tpu_custom_call.1} parent=5 // pred_check_branch
        %167 = sbr.rel (%p164) target = $region12
      $region11: #{tpu_custom_call.1} parent=5 // pred_region
        %s168 = ssub.s32 %s18, 1
        // Predicated region
        $region13: #{tpu_custom_call.1} parent=11 // pred_check
          %p169 = pneg %p65
        $region14: #{tpu_custom_call.1} parent=11 // pred_check_branch
          %171 = sbr.rel (%p169) target = $region16
        $region15: #{tpu_custom_call.1} parent=11 // pred_region
          %s173 = ssub.s32 2048, 2048
          %174 = vsyncadd [#allocation6], %s173
          %s175 = sshll.u32 [#allocation5], 4
          %s176 = int_to_ptr.vmem [resolvable:$true] %s175
          %181 = dma.hbm_to_vmem [thread:$0]  %s1, 2048, %s176, [#allocation6], 128, 128, 8
        $region16: #{tpu_custom_call.1} parent=11 // pred_fallthru
          _
        // Predicated region
        $region17: #{tpu_custom_call.1} parent=11 // pred_check
          %p182 = pneg %p86
        $region18: #{tpu_custom_call.1} parent=11 // pred_check_branch
          %184 = sbr.rel (%p182) target = $region20
        $region19: #{tpu_custom_call.1} parent=11 // pred_region
          _
        $region20: #{tpu_custom_call.1} parent=11 // pred_fallthru
          _
        // Predicated region
        $region21: #{tpu_custom_call.1} parent=11 // pred_check
          %p185 = pneg %p107
        $region22: #{tpu_custom_call.1} parent=11 // pred_check_branch
          %187 = sbr.rel (%p185) target = $region24
        $region23: #{tpu_custom_call.1} parent=11 // pred_region
          %s189 = ssub.s32 2048, 2048
          %190 = vsyncadd [#allocation6], %s189
          %s191 = sshll.u32 [#allocation7], 4
          %s192 = int_to_ptr.vmem [resolvable:$true] %s191
          %197 = dma.hbm_to_vmem [thread:$0]  %s3, 2048, %s192, [#allocation6], 128, 128, 8
        $region24: #{tpu_custom_call.1} parent=11 // pred_fallthru
          _
        // Predicated region
        $region25: #{tpu_custom_call.1} parent=11 // pred_check
          %p198 = pneg %p128
        $region26: #{tpu_custom_call.1} parent=11 // pred_check_branch
          %200 = sbr.rel (%p198) target = $region28
        $region27: #{tpu_custom_call.1} parent=11 // pred_region
          _
        $region28: #{tpu_custom_call.1} parent=11 // pred_fallthru
          _
      $region12: #{tpu_custom_call.1} parent=5 // pred_fallthru
        _
      %p201 = scmp.lt.s32.totalorder %s18, 2
      // Predicated region
      $region29: #{tpu_custom_call.1} parent=5 // pred_check
        %p202 = pneg %p201
      $region30: #{tpu_custom_call.1} parent=5 // pred_check_branch
        %204 = sbr.rel (%p202) target = $region32
      $region31: #{tpu_custom_call.1} parent=5 // pred_region
        // Predicated region
        $region33: #{tpu_custom_call.1} parent=31 // pred_check
          %p205 = pneg %p38
        $region34: #{tpu_custom_call.1} parent=31 // pred_check_branch
          %207 = sbr.rel (%p205) target = $region36
        $region35: #{tpu_custom_call.1} parent=31 // pred_region
          %s208 = sand.u32 %s28, 1
          %s209 = scalar_lea.sflag [#allocation3], %s208
          %s210 = sand.u32 %s28, 1
          %s211 = smul.addr %s210, 8
          %s212 = scalar_lea.vmem [#allocation2], %s211
          %s214 = ssub.s32 128, 128
          %215 = vsyncadd %s209, %s214
          %s216 = smul.addr %s18, 128
          %s217 = scalar_lea.hbm %s0, %s216
          %s219 = sshll.u32 %s212, 4
          %s220 = int_to_ptr.vmem [resolvable:$true] %s219
          %222 = dma.hbm_to_vmem [thread:$0]  %s217, 128, %s220, %s209
        $region36: #{tpu_custom_call.1} parent=31 // pred_fallthru
          _
      $region32: #{tpu_custom_call.1} parent=5 // pred_fallthru
        _
      %p223 = scmp.le.s32.totalorder 1, %s18
      %p224 = scmp.lt.s32.totalorder %s18, 3
      %p225 = pnand %p223, %p224
      %p226 = pneg %p225
      // Predicated region
      $region37: #{tpu_custom_call.1} parent=5 // pred_check
        _
      $region38: #{tpu_custom_call.1} parent=5 // pred_check_branch
        %228 = sbr.rel (%p225) target = $region40
      $region39: #{tpu_custom_call.1} parent=5 // pred_region
        %s229 = ssub.s32 %s18, 1
        %s230 = sand.u32 %s31, 1
        %s231 = scalar_lea.sflag [#allocation3], %s230
        %s232 = sand.u32 %s31, 1
        %s233 = smul.addr %s232, 8
        %s234 = scalar_lea.vmem [#allocation2], %s233
        // Predicated region
        $region41: #{tpu_custom_call.1} parent=39 // pred_check
          %p235 = pneg %p44
        $region42: #{tpu_custom_call.1} parent=39 // pred_check_branch
          %237 = sbr.rel (%p235) target = $region44
        $region43: #{tpu_custom_call.1} parent=39 // pred_region
          %238 = dma.done %s231, 128
        $region44: #{tpu_custom_call.1} parent=39 // pred_fallthru
          _
        // Predicated region
        $region45: #{tpu_custom_call.1} parent=39 // pred_check
          %p239 = pneg %p65
        $region46: #{tpu_custom_call.1} parent=39 // pred_check_branch
          %241 = sbr.rel (%p239) target = $region48
        $region47: #{tpu_custom_call.1} parent=39 // pred_region
          %242 = dma.done [#allocation6], 2048
        $region48: #{tpu_custom_call.1} parent=39 // pred_fallthru
          _
        // Predicated region
        $region49: #{tpu_custom_call.1} parent=39 // pred_check
          %p243 = pneg %p107
        $region50: #{tpu_custom_call.1} parent=39 // pred_check_branch
          %245 = sbr.rel (%p243) target = $region52
        $region51: #{tpu_custom_call.1} parent=39 // pred_region
          %246 = dma.done [#allocation6], 2048
        $region52: #{tpu_custom_call.1} parent=39 // pred_fallthru
          _
        %s247 = sand.u32 %s31, 1
        %s248 = scalar_lea.sflag [#allocation3], %s247
        %s249 = sand.u32 %s31, 1
        %s250 = smul.addr %s249, 8
        %s251 = scalar_lea.vmem [#allocation2], %s250
        %p252 = pneg %p44
        %p253 = pneg %p41
        %p254 = pneg %p65
        %p255 = pneg %p62
        %p256 = pneg %p86
        %p257 = pneg %p83
        %p258 = pneg %p107
        %p259 = pneg %p104
        %p260 = pneg %p128
        %p261 = pneg %p125
        %p262 = pneg %p154
        %p263 = pneg %p151
        %s264 = sand.u32 %s141, 1
        %s265 = scalar_lea.sflag [#allocation4], %s264
        %s266 = sand.u32 %s141, 1
        %s267 = smul.addr %s266, 8
        %s268 = scalar_lea.vmem [#allocation8], %s267
        %v269 = vld [vmem:[%s234] sm:$0xff]
        %v270 = vld [vmem:[#allocation5] sm:$0xff]
        %v271 = vld [vmem:[#allocation5 + $0x8] sm:$0xff]
        %v272 = vld [vmem:[#allocation5 + $0x10] sm:$0xff]
        %v273 = vld [vmem:[#allocation5 + $0x18] sm:$0xff]
        %v274 = vld [vmem:[#allocation5 + $0x20] sm:$0xff]
        %v275 = vld [vmem:[#allocation5 + $0x28] sm:$0xff]
        %v276 = vld [vmem:[#allocation5 + $0x30] sm:$0xff]
        %v277 = vld [vmem:[#allocation5 + $0x38] sm:$0xff]
        %v278 = vld [vmem:[#allocation5 + $0x40] sm:$0xff]
        %v279 = vld [vmem:[#allocation5 + $0x48] sm:$0xff]
        %v280 = vld [vmem:[#allocation5 + $0x50] sm:$0xff]
        %v281 = vld [vmem:[#allocation5 + $0x58] sm:$0xff]
        %v282 = vld [vmem:[#allocation5 + $0x60] sm:$0xff]
        %v283 = vld [vmem:[#allocation5 + $0x68] sm:$0xff]
        %v284 = vld [vmem:[#allocation5 + $0x70] sm:$0xff]
        %v285 = vld [vmem:[#allocation5 + $0x78] sm:$0xff]
        %v286 = vld [vmem:[%s2] sm:$0x1]
        %v288 = vlaneseq
        %v289 = vshrl.u32 %v288, 7
        %v290 = vsub.s32 0, %v289
        %v291 = vrot.slane %v286, %v290
        %293 = vmatprep.subr.mxu0 0.0
        %294 = vmatpush1.msra.mxu0 %v285
        %295 = vmatprep.subr.mxu0 0.0
        %296 = vmatpush1.msra.mxu0 %v284
        %297 = vmatprep.subr.mxu0 0.0
        %298 = vmatpush1.msra.mxu0 %v283
        %299 = vmatprep.subr.mxu0 0.0
        %300 = vmatpush1.msra.mxu0 %v282
        %301 = vmatprep.subr.mxu0 0.0
        %302 = vmatpush1.msra.mxu0 %v281
        %303 = vmatprep.subr.mxu0 0.0
        %304 = vmatpush1.msra.mxu0 %v280
        %305 = vmatprep.subr.mxu0 0.0
        %306 = vmatpush1.msra.mxu0 %v279
        %307 = vmatprep.subr.mxu0 0.0
        %308 = vmatpush1.msra.mxu0 %v278
        %309 = vmatprep.subr.mxu0 0.0
        %310 = vmatpush1.msra.mxu0 %v277
        %311 = vmatprep.subr.mxu0 0.0
        %312 = vmatpush1.msra.mxu0 %v276
        %313 = vmatprep.subr.mxu0 0.0
        %314 = vmatpush1.msra.mxu0 %v275
        %315 = vmatprep.subr.mxu0 0.0
        %316 = vmatpush1.msra.mxu0 %v274
        %317 = vmatprep.subr.mxu0 0.0
        %318 = vmatpush1.msra.mxu0 %v273
        %319 = vmatprep.subr.mxu0 0.0
        %320 = vmatpush1.msra.mxu0 %v272
        %321 = vmatprep.subr.mxu0 0.0
        %322 = vmatpush1.msra.mxu0 %v271
        %323 = vmatprep.subr.mxu0 0.0
        %324 = vmatpush1.msra.mxu0 %v270
        %325 = vmatprep.subr.mxu0 0.0
        %326 = vmatpush2.msra.mxu0 0.0
        %327 = vmatprep.subr.mxu0 0.0
        %328 = vmatpush2.msra.mxu0 0.0
        %329 = vmatprep.subr.mxu0 0.0
        %330 = vmatpush2.msra.mxu0 0.0
        %331 = vmatprep.subr.mxu0 0.0
        %332 = vmatpush2.msra.mxu0 0.0
        %333 = vmatprep.subr.mxu0 0.0
        %334 = vmatpush2.msra.mxu0 0.0
        %335 = vmatprep.subr.mxu0 0.0
        %336 = vmatpush2.msra.mxu0 0.0
        %337 = vmatprep.subr.mxu0 0.0
        %338 = vmatpush2.msra.mxu0 0.0
        %339 = vmatprep.subr.mxu0 0.0
        %340 = vmatpush2.msra.mxu0 0.0
        %341 = vmatprep.subr.mxu0 0.0
        %342 = vmatpush2.msra.mxu0 0.0
        %343 = vmatprep.subr.mxu0 0.0
        %344 = vmatpush2.msra.mxu0 0.0
        %345 = vmatprep.subr.mxu0 0.0
        %346 = vmatpush2.msra.mxu0 0.0
        %347 = vmatprep.subr.mxu0 0.0
        %348 = vmatpush2.msra.mxu0 0.0
        %349 = vmatprep.subr.mxu0 0.0
        %350 = vmatpush2.msra.mxu0 0.0
        %351 = vmatprep.subr.mxu0 0.0
        %352 = vmatpush2.msra.mxu0 0.0
        %353 = vmatprep.subr.mxu0 0.0
        %354 = vmatpush2.msra.mxu0 0.0
        %355 = vmatprep.subr.mxu0 0.0
        %356 = vmatpush2.msra.mxu0 0.0
        %357 = vmatprep.mubr.f32.mxu0 0.0
        %358 = vmatmul.mubr.f32.gmra.mxu0 %v269
        %v359 = vpop.f32.mrf.mxu0
        %v360 = vadd.f32 %v291, %v359
        %v361 = vpop.f32.mrf.mxu0
        %362 = vdwg.mxu0
        %v363 = vmul.f32 %v360, 0.5
        %v364 = vmul.f32 %v360, 0.70710677
        %v365 = verf.f32.pop %v364
        %v366 = vadd.f32 %v365, 1.0
        %v367 = vmul.f32 %v363, %v366
        %v368 = vld [vmem:[#allocation7] sm:$0xff]
        %v369 = vld [vmem:[#allocation7 + $0x8] sm:$0xff]
        %v370 = vld [vmem:[#allocation7 + $0x10] sm:$0xff]
        %v371 = vld [vmem:[#allocation7 + $0x18] sm:$0xff]
        %v372 = vld [vmem:[#allocation7 + $0x20] sm:$0xff]
        %v373 = vld [vmem:[#allocation7 + $0x28] sm:$0xff]
        %v374 = vld [vmem:[#allocation7 + $0x30] sm:$0xff]
        %v375 = vld [vmem:[#allocation7 + $0x38] sm:$0xff]
        %v376 = vld [vmem:[#allocation7 + $0x40] sm:$0xff]
        %v377 = vld [vmem:[#allocation7 + $0x48] sm:$0xff]
        %v378 = vld [vmem:[#allocation7 + $0x50] sm:$0xff]
        %v379 = vld [vmem:[#allocation7 + $0x58] sm:$0xff]
        %v380 = vld [vmem:[#allocation7 + $0x60] sm:$0xff]
        %v381 = vld [vmem:[#allocation7 + $0x68] sm:$0xff]
        %v382 = vld [vmem:[#allocation7 + $0x70] sm:$0xff]
        %v383 = vld [vmem:[#allocation7 + $0x78] sm:$0xff]
        %v384 = vld [vmem:[%s4] sm:$0x1]
        %v386 = vlaneseq
        %v387 = vshrl.u32 %v386, 7
        %v388 = vsub.s32 0, %v387
        %v389 = vrot.slane %v384, %v388
        %391 = vmatprep.subr.mxu0 0.0
        %392 = vmatpush1.msra.mxu0 %v383
        %393 = vmatprep.subr.mxu0 0.0
        %394 = vmatpush1.msra.mxu0 %v382
        %395 = vmatprep.subr.mxu0 0.0
        %396 = vmatpush1.msra.mxu0 %v381
        %397 = vmatprep.subr.mxu0 0.0
        %398 = vmatpush1.msra.mxu0 %v380
        %399 = vmatprep.subr.mxu0 0.0
        %400 = vmatpush1.msra.mxu0 %v379
        %401 = vmatprep.subr.mxu0 0.0
        %402 = vmatpush1.msra.mxu0 %v378
        %403 = vmatprep.subr.mxu0 0.0
        %404 = vmatpush1.msra.mxu0 %v377
        %405 = vmatprep.subr.mxu0 0.0
        %406 = vmatpush1.msra.mxu0 %v376
        %407 = vmatprep.subr.mxu0 0.0
        %408 = vmatpush1.msra.mxu0 %v375
        %409 = vmatprep.subr.mxu0 0.0
        %410 = vmatpush1.msra.mxu0 %v374
        %411 = vmatprep.subr.mxu0 0.0
        %412 = vmatpush1.msra.mxu0 %v373
        %413 = vmatprep.subr.mxu0 0.0
        %414 = vmatpush1.msra.mxu0 %v372
        %415 = vmatprep.subr.mxu0 0.0
        %416 = vmatpush1.msra.mxu0 %v371
        %417 = vmatprep.subr.mxu0 0.0
        %418 = vmatpush1.msra.mxu0 %v370
        %419 = vmatprep.subr.mxu0 0.0
        %420 = vmatpush1.msra.mxu0 %v369
        %421 = vmatprep.subr.mxu0 0.0
        %422 = vmatpush1.msra.mxu0 %v368
        %423 = vmatprep.subr.mxu0 0.0
        %424 = vmatpush2.msra.mxu0 0.0
        %425 = vmatprep.subr.mxu0 0.0
        %426 = vmatpush2.msra.mxu0 0.0
        %427 = vmatprep.subr.mxu0 0.0
        %428 = vmatpush2.msra.mxu0 0.0
        %429 = vmatprep.subr.mxu0 0.0
        %430 = vmatpush2.msra.mxu0 0.0
        %431 = vmatprep.subr.mxu0 0.0
        %432 = vmatpush2.msra.mxu0 0.0
        %433 = vmatprep.subr.mxu0 0.0
        %434 = vmatpush2.msra.mxu0 0.0
        %435 = vmatprep.subr.mxu0 0.0
        %436 = vmatpush2.msra.mxu0 0.0
        %437 = vmatprep.subr.mxu0 0.0
        %438 = vmatpush2.msra.mxu0 0.0
        %439 = vmatprep.subr.mxu0 0.0
        %440 = vmatpush2.msra.mxu0 0.0
        %441 = vmatprep.subr.mxu0 0.0
        %442 = vmatpush2.msra.mxu0 0.0
        %443 = vmatprep.subr.mxu0 0.0
        %444 = vmatpush2.msra.mxu0 0.0
        %445 = vmatprep.subr.mxu0 0.0
        %446 = vmatpush2.msra.mxu0 0.0
        %447 = vmatprep.subr.mxu0 0.0
        %448 = vmatpush2.msra.mxu0 0.0
        %449 = vmatprep.subr.mxu0 0.0
        %450 = vmatpush2.msra.mxu0 0.0
        %451 = vmatprep.subr.mxu0 0.0
        %452 = vmatpush2.msra.mxu0 0.0
        %453 = vmatprep.subr.mxu0 0.0
        %454 = vmatpush2.msra.mxu0 0.0
        %455 = vmatprep.mubr.f32.mxu0 0.0
        %456 = vmatmul.mubr.f32.gmra.mxu0 %v367
        %v457 = vpop.f32.mrf.mxu0
        %v458 = vadd.f32 %v389, %v457
        %v459 = vpop.f32.mrf.mxu0
        %460 = vdwg.mxu0
        %461 = vst [vmem:[%s268] sm:$0xff] %v458
        %s462 = sand.u32 %s141, 1
        %s463 = scalar_lea.sflag [#allocation4], %s462
        %s464 = sand.u32 %s141, 1
        %s465 = smul.addr %s464, 8
        %s466 = scalar_lea.vmem [#allocation8], %s465
        // Predicated region
        $region53: #{tpu_custom_call.1} parent=39 // pred_check
          %p467 = pneg %p151
        $region54: #{tpu_custom_call.1} parent=39 // pred_check_branch
          %469 = sbr.rel (%p467) target = $region56
        $region55: #{tpu_custom_call.1} parent=39 // pred_region
          %s471 = ssub.s32 128, 128
          %472 = vsyncadd %s463, %s471
          %s473 = smul.addr %s23, 128
          %s474 = scalar_lea.hbm %s5, %s473
          %s476 = sshll.u32 %s466, 4
          %s477 = int_to_ptr.vmem [resolvable:$true] %s476
          %479 = dma.vmem_to_hbm [thread:$0]  %s477, 128, %s474, %s463
        $region56: #{tpu_custom_call.1} parent=39 // pred_fallthru
          _
      $region40: #{tpu_custom_call.1} parent=5 // pred_fallthru
        _
      %p480 = scmp.le.s32.totalorder 2, %s18
      // Predicated region
      $region57: #{tpu_custom_call.1} parent=5 // pred_check
        %p481 = pneg %p480
      $region58: #{tpu_custom_call.1} parent=5 // pred_check_branch
        %483 = sbr.rel (%p481) target = $region60
      $region59: #{tpu_custom_call.1} parent=5 // pred_region
        %s484 = ssub.s32 %s18, 2
        // Predicated region
        $region61: #{tpu_custom_call.1} parent=59 // pred_check
          %p485 = pneg %p157
        $region62: #{tpu_custom_call.1} parent=59 // pred_check_branch
          %487 = sbr.rel (%p485) target = $region64
        $region63: #{tpu_custom_call.1} parent=59 // pred_region
          %s488 = sand.u32 %s142, 1
          %s489 = scalar_lea.sflag [#allocation4], %s488
          %s490 = sand.u32 %s142, 1
          %s491 = smul.addr %s490, 8
          %s492 = scalar_lea.vmem [#allocation8], %s491
          %493 = dma.done %s489, 128
        $region64: #{tpu_custom_call.1} parent=59 // pred_fallthru
          _
      $region60: #{tpu_custom_call.1} parent=5 // pred_fallthru
        _
    $region6: #{tpu_custom_call.1} parent=1 // loop_footer
      %s22 = sadd.s32 1, %s18
    $region7: #{tpu_custom_call.1} parent=1 // loop_footer_branch
      %17 = sbr.rel target = $region3
    $region8: #{tpu_custom_call.1} parent=1 // loop_exit
      _
    %494 = vsyncpa [#allocation3], 1
    %s495 = scalar_lea.sflag [#allocation3], 1
    %496 = vsyncpa %s495, 1
    %497 = vsyncpa [#allocation6], 1
    %498 = vsyncpa [#allocation4], 1
    %s499 = scalar_lea.sflag [#allocation4], 1
    %500 = vsyncpa %s499, 1

</llo_original>
